<compile_context>
chip_gen: v6e
topology: v6e:2x2x1
jax: 0.10.0
libtpu: 0.0.40
codegen_flags: <defaults>
</compile_context>

<pallas_src>
import math

import jax
import jax.numpy as jnp
from jax import lax
from jax.experimental import pallas as pl
from jax.experimental.pallas import tpu as pltpu

_EPS = 1e-5
_LANE = 128
_MAX_FOLD_LANES = 4096        # cap on folded lane width
_MAX_SEL_ELEMS = 262144       # cap on selector-matrix size (1 MiB of f32)


def _vmem_limit_bytes():
    """Generation-aware scoped-VMEM limit."""
    try:
        cap = int(pltpu.get_tpu_info().vmem_capacity_bytes)
    except Exception:
        cap = 64 * 1024 * 1024          # assume the smallest (v7x: 64 MiB / TC)
    # v5e/v6e (128 MiB physical) -> 64 MiB limit; v7x (64 MiB) -> 48 MiB.
    return min((cap * 3) // 4, 64 * 1024 * 1024)


def _sublane(dtype):
    # sublane packing: 8 for 4-byte, 16 for 2-byte, 32 for 1-byte dtypes
    itemsize = jnp.dtype(dtype).itemsize
    return max(8, 32 // max(itemsize, 1))


def _round_up(x, m):
    return ((x + m - 1) // m) * m


def _per_row_vmem_bytes(lanes, dtype):
    # 2x double-buffered input tile + 2x double-buffered output tile in the
    # native dtype, plus ~4 f32-sized temporaries live in the kernel body.
    itemsize = jnp.dtype(dtype).itemsize
    return lanes * (4 * itemsize + 16)


def _pick_block_rows(n_rows, lanes, dtype, vmem_limit):
    """Largest sublane-aligned row tile that fits the VMEM budget while
    leaving >= 2 grid steps (megacore sharding on v7x) when possible."""
    sub = _sublane(dtype)
    budget = (vmem_limit * 3) // 5          # leave ~40% headroom for compiler
    rows = max(sub, budget // _per_row_vmem_bytes(lanes, dtype))
    if n_rows >= 2 * sub:
        rows = min(rows, _round_up(pl.cdiv(n_rows, 2), sub))
    rows = min(rows, n_rows)
    if rows < n_rows:
        rows = max(sub, (rows // sub) * sub)
    return rows


def _rows_kernel(has_bias):
    """General path: normalize over the lane axis (lanes == D)."""

    def kernel(x_ref, w_ref, *rest):
        if has_bias:
            b_ref, o_ref = rest
        else:
            (o_ref,) = rest
        x = x_ref[...].astype(jnp.float32)               # (bm, D)
        inv_d = 1.0 / x.shape[-1]
        mean = jnp.sum(x, axis=-1, keepdims=True) * inv_d
        msq = jnp.sum(x * x, axis=-1, keepdims=True) * inv_d
        var = jnp.maximum(msq - mean * mean, 0.0)
        inv = lax.rsqrt(var + _EPS)
        y = (x - mean) * inv * w_ref[...]                 # w pre-cast to f32
        if has_bias:
            y = y + b_ref[...]
        o_ref[...] = y.astype(o_ref.dtype)

    return kernel


def _folded_kernel(has_bias, d, fold):
    """Lane-dense path: `fold` rows folded into the lane axis (lanes = fold*D).

    Per-row segmented reductions run on the (otherwise idle) MXU via a 0/1
    selector matrix generated in-kernel with iota comparisons, so all VPU work
    and all loads/stores stay lane-dense (unmasked vst)."""
    lanes = fold * d
    inv_d = 1.0 / d

    def kernel(x_ref, w_ref, *rest):
        if has_bias:
            b_ref, o_ref = rest
        else:
            (o_ref,) = rest
        x = x_ref[...].astype(jnp.float32)                # (bm, lanes)

        lane = lax.broadcasted_iota(jnp.int32, (lanes, fold), 0)
        grp = lax.broadcasted_iota(jnp.int32, (lanes, fold), 1)
        sel = ((lane >= grp * d) & (lane < (grp + 1) * d)).astype(jnp.float32)
        lane_t = lax.broadcasted_iota(jnp.int32, (fold, lanes), 1)
        grp_t = lax.broadcasted_iota(jnp.int32, (fold, lanes), 0)
        sel_t = ((lane_t >= grp_t * d) &
                 (lane_t < (grp_t + 1) * d)).astype(jnp.float32)

        seg_sum = jnp.dot(x, sel, preferred_element_type=jnp.float32)     # (bm, fold)
        seg_sq = jnp.dot(x * x, sel, preferred_element_type=jnp.float32)  # (bm, fold)
        mean = seg_sum * inv_d
        var = jnp.maximum(seg_sq * inv_d - mean * mean, 0.0)
        inv = lax.rsqrt(var + _EPS)
        mean_f = jnp.dot(mean, sel_t, preferred_element_type=jnp.float32)  # (bm, lanes)
        inv_f = jnp.dot(inv, sel_t, preferred_element_type=jnp.float32)    # (bm, lanes)

        y = (x - mean_f) * inv_f * w_ref[...]
        if has_bias:
            y = y + b_ref[...]
        o_ref[...] = y.astype(o_ref.dtype)

    return kernel


def _layer_norm_ref(x, w, b):
    xf = x.astype(jnp.float32)
    mean = jnp.mean(xf, axis=-1, keepdims=True)
    var = jnp.mean((xf - mean) ** 2, axis=-1, keepdims=True)
    y = (xf - mean) * lax.rsqrt(var + _EPS) * w.astype(jnp.float32)
    if b is not None:
        y = y + b.astype(jnp.float32)
    return y.astype(x.dtype)


def layer_norm_pallas(x, weight, bias=None, *, block_rows=None):
    """F.layer_norm(x, (D,), weight, bias, eps=1e-5) over the last dim of x."""
    orig_shape = x.shape
    D = orig_shape[-1]
    assert weight.shape == (D,)
    has_bias = bias is not None
    out_dtype = x.dtype

    vmem_limit = _vmem_limit_bytes()

    x2 = x.reshape(-1, D)
    R = x2.shape[0]

    # Lane-dense fold: pack `fold` rows into the lane axis so fold*D is a
    # multiple of 128 and every load/store is a full-width (unmasked) vst.
    fold = _LANE // math.gcd(D, _LANE)
    lanes = fold * D
    if fold > 1 and (lanes > _MAX_FOLD_LANES or lanes * fold > _MAX_SEL_ELEMS):
        fold, lanes = 1, D

    # Robustness: if even the minimum (sublane, lanes) tile does not fit the
    # VMEM budget (huge D), fall back to XLA.
    # TODO(synk): K-block very large normalized dims instead of falling back.
    if _sublane(x.dtype) * _per_row_vmem_bytes(lanes, x.dtype) > (vmem_limit * 3) // 5:
        return _layer_norm_ref(x, weight, bias)

    w_f32 = weight.astype(jnp.float32)
    b_f32 = bias.astype(jnp.float32) if has_bias else None

    if fold > 1:
        r_pad = _round_up(R, fold)
        if r_pad != R:
            x2 = jnp.pad(x2, ((0, r_pad - R), (0, 0)))
        rows = r_pad // fold
        xk = x2.reshape(rows, lanes)
        w_in = jnp.tile(w_f32, fold).reshape(1, lanes)
        b_in = jnp.tile(b_f32, fold).reshape(1, lanes) if has_bias else None
        kernel = _folded_kernel(has_bias, D, fold)
    else:
        rows = R
        xk = x2
        w_in = w_f32.reshape(1, D)
        b_in = b_f32.reshape(1, D) if has_bias else None
        kernel = _rows_kernel(has_bias)

    if block_rows is None:
        bm = _pick_block_rows(rows, lanes, x.dtype, vmem_limit)
    else:
        sub = _sublane(x.dtype)
        bm = min(block_rows, rows)
        if bm < rows:
            bm = max(sub, (bm // sub) * sub)

    grid = (pl.cdiv(rows, bm),)

    in_arrays = [xk, w_in]
    in_specs = [
        pl.BlockSpec((bm, lanes), lambda i: (i, 0)),
        pl.BlockSpec((1, lanes), lambda i: (0, 0)),
    ]
    if has_bias:
        in_arrays.append(b_in)
        in_specs.append(pl.BlockSpec((1, lanes), lambda i: (0, 0)))

    out = pl.pallas_call(
        kernel,
        out_shape=jax.ShapeDtypeStruct((rows, lanes), out_dtype),
        grid_spec=pltpu.PrefetchScalarGridSpec(
            num_scalar_prefetch=0,
            grid=grid,
            in_specs=in_specs,
            out_specs=pl.BlockSpec((bm, lanes), lambda i: (i, 0)),
        ),
        compiler_params=pltpu.CompilerParams(
            dimension_semantics=("parallel",),
            vmem_limit_bytes=vmem_limit,
        ),
    )(*in_arrays)

    if fold > 1:
        out = out.reshape(-1, D)[:R]
    return out.reshape(orig_shape)


if __name__ == "__main__":
    key = jax.random.PRNGKey(0)
    k1, k2, k3, k4, k5, k6, k7 = jax.random.split(key, 7)

    # 1) Small-D folded (lane-dense) path, with bias: batch=2, seq=8, hidden=32
    x = jax.random.normal(k1, (2, 8, 32), dtype=jnp.float32)
    w = 1.0 + 0.1 * jax.random.normal(k2, (32,), dtype=jnp.float32)
    b = 0.1 * jax.random.normal(k3, (32,), dtype=jnp.float32)
    y = jax.block_until_ready(layer_norm_pallas(x, w, b))
    assert jnp.allclose(y, _layer_norm_ref(x, w, b), atol=1e-4, rtol=1e-4)

    # 2) Same shape, bias=None (bias-free kernel variant)
    y_nb = jax.block_until_ready(layer_norm_pallas(x, w, None))
    assert jnp.allclose(y_nb, _layer_norm_ref(x, w, None), atol=1e-4, rtol=1e-4)

    # 3) Generalized fold (D=200 -> fold=16, lanes=3200) + row padding (R=15)
    x2 = jax.random.normal(k4, (3, 5, 200), dtype=jnp.float32)
    w2 = 1.0 + 0.1 * jax.random.normal(k5, (200,), dtype=jnp.float32)
    b2 = 0.1 * jax.random.normal(k6, (200,), dtype=jnp.float32)
    y2 = jax.block_until_ready(layer_norm_pallas(x2, w2, b2))
    assert jnp.allclose(y2, _layer_norm_ref(x2, w2, b2), atol=1e-4, rtol=1e-4)

    # 4) General rows path (D=256 multiple of 128), >=2 grid steps, ragged rows
    x3 = jax.random.normal(k7, (3, 8, 256), dtype=jnp.float32)
    w3 = 1.0 + 0.1 * jax.random.normal(k2, (256,), dtype=jnp.float32)
    b3 = 0.1 * jax.random.normal(k3, (256,), dtype=jnp.float32)
    y3 = jax.block_until_ready(layer_norm_pallas(x3, w3, b3))
    assert jnp.allclose(y3, _layer_norm_ref(x3, w3, b3), atol=1e-4, rtol=1e-4)

    print("KERNEL_OK")
</pallas_src>

<mosaic_0001>
module attributes {stable_mosaic.version = 11 : i64} {
  func.func @kernel(%arg0: i32, %arg1: memref<4x128xf32, #tpu.memory_space<vmem>>, %arg2: memref<1x128xf32, #tpu.memory_space<vmem>>, %arg3: memref<1x128xf32, #tpu.memory_space<vmem>>, %arg4: memref<4x128xf32, #tpu.memory_space<vmem>>) attributes {dimension_semantics = [#tpu.dimension_semantics<parallel>], iteration_bounds = array<i64: 1>, scalar_prefetch = 0 : i64, scratch_operands = 0 : i64, tpu.core_type = #tpu.core_type<tc>, window_params = [{transform_indices = @transform_0, window_bounds = array<i64: 4, 128>}, {pipeline_mode = #tpu.pipeline_mode<synchronous>, transform_indices = @transform_1, window_bounds = array<i64: 1, 128>}, {pipeline_mode = #tpu.pipeline_mode<synchronous>, transform_indices = @transform_2, window_bounds = array<i64: 1, 128>}, {transform_indices = @transform_3, window_bounds = array<i64: 4, 128>}]} {
    %c0 = arith.constant 0 : index
    %c0_0 = arith.constant 0 : index
    %0 = vector.load %arg1[%c0, %c0_0] : memref<4x128xf32, #tpu.memory_space<vmem>>, vector<4x128xf32>
    %1 = tpu.iota {dimensions = array<i32: 0>} : vector<128x4xi32>
    %2 = tpu.iota {dimensions = array<i32: 1>} : vector<128x4xi32>
    %c32_i32 = arith.constant 32 : i32
    %3 = vector.broadcast %c32_i32 : i32 to vector<128x4xi32>
    %4 = arith.muli %2, %3 : vector<128x4xi32>
    %5 = arith.cmpi sge, %1, %4 : vector<128x4xi32>
    %c1_i32 = arith.constant 1 : i32
    %6 = vector.broadcast %c1_i32 : i32 to vector<128x4xi32>
    %7 = arith.addi %2, %6 : vector<128x4xi32>
    %c32_i32_1 = arith.constant 32 : i32
    %8 = vector.broadcast %c32_i32_1 : i32 to vector<128x4xi32>
    %9 = arith.muli %7, %8 : vector<128x4xi32>
    %10 = arith.cmpi slt, %1, %9 : vector<128x4xi32>
    %11 = arith.andi %5, %10 : vector<128x4xi1>
    %12 = arith.extui %11 : vector<128x4xi1> to vector<128x4xi32>
    %13 = arith.sitofp %12 : vector<128x4xi32> to vector<128x4xf32>
    %14 = tpu.iota {dimensions = array<i32: 1>} : vector<4x128xi32>
    %15 = tpu.iota {dimensions = array<i32: 0>} : vector<4x128xi32>
    %c32_i32_2 = arith.constant 32 : i32
    %16 = vector.broadcast %c32_i32_2 : i32 to vector<4x128xi32>
    %17 = arith.muli %15, %16 : vector<4x128xi32>
    %18 = arith.cmpi sge, %14, %17 : vector<4x128xi32>
    %c1_i32_3 = arith.constant 1 : i32
    %19 = vector.broadcast %c1_i32_3 : i32 to vector<4x128xi32>
    %20 = arith.addi %15, %19 : vector<4x128xi32>
    %c32_i32_4 = arith.constant 32 : i32
    %21 = vector.broadcast %c32_i32_4 : i32 to vector<4x128xi32>
    %22 = arith.muli %20, %21 : vector<4x128xi32>
    %23 = arith.cmpi slt, %14, %22 : vector<4x128xi32>
    %24 = arith.andi %18, %23 : vector<4x128xi1>
    %25 = arith.extui %24 : vector<4x128xi1> to vector<4x128xi32>
    %26 = arith.sitofp %25 : vector<4x128xi32> to vector<4x128xf32>
    %cst = arith.constant dense<0.000000e+00> : vector<4x4xf32>
    %27 = tpu.matmul %0, %13, %cst {dimension_numbers = #tpu.dot_dimension_numbers<[1], [0], [0], [1], [0, 0, 1, 1], [], []>} : vector<4x128xf32>, vector<128x4xf32>, vector<4x4xf32> -> vector<4x4xf32>
    %28 = arith.mulf %0, %0 : vector<4x128xf32>
    %cst_5 = arith.constant dense<0.000000e+00> : vector<4x4xf32>
    %29 = tpu.matmul %28, %13, %cst_5 {dimension_numbers = #tpu.dot_dimension_numbers<[1], [0], [0], [1], [0, 0, 1, 1], [], []>} : vector<4x128xf32>, vector<128x4xf32>, vector<4x4xf32> -> vector<4x4xf32>
    %cst_6 = arith.constant 3.125000e-02 : f32
    %30 = vector.broadcast %cst_6 : f32 to vector<4x4xf32>
    %31 = arith.mulf %27, %30 : vector<4x4xf32>
    %cst_7 = arith.constant 3.125000e-02 : f32
    %32 = vector.broadcast %cst_7 : f32 to vector<4x4xf32>
    %33 = arith.mulf %29, %32 : vector<4x4xf32>
    %34 = arith.mulf %31, %31 : vector<4x4xf32>
    %35 = arith.subf %33, %34 : vector<4x4xf32>
    %cst_8 = arith.constant 0.000000e+00 : f32
    %36 = vector.broadcast %cst_8 : f32 to vector<4x4xf32>
    %37 = arith.maximumf %35, %36 : vector<4x4xf32>
    %cst_9 = arith.constant 9.99999974E-6 : f32
    %38 = vector.broadcast %cst_9 : f32 to vector<4x4xf32>
    %39 = arith.addf %37, %38 : vector<4x4xf32>
    %40 = math.rsqrt %39 : vector<4x4xf32>
    %cst_10 = arith.constant dense<0.000000e+00> : vector<4x128xf32>
    %41 = tpu.matmul %31, %26, %cst_10 {dimension_numbers = #tpu.dot_dimension_numbers<[1], [0], [0], [1], [0, 0, 1, 1], [], []>} : vector<4x4xf32>, vector<4x128xf32>, vector<4x128xf32> -> vector<4x128xf32>
    %cst_11 = arith.constant dense<0.000000e+00> : vector<4x128xf32>
    %42 = tpu.matmul %40, %26, %cst_11 {dimension_numbers = #tpu.dot_dimension_numbers<[1], [0], [0], [1], [0, 0, 1, 1], [], []>} : vector<4x4xf32>, vector<4x128xf32>, vector<4x128xf32> -> vector<4x128xf32>
    %43 = arith.subf %0, %41 : vector<4x128xf32>
    %44 = arith.mulf %43, %42 : vector<4x128xf32>
    %c0_12 = arith.constant 0 : index
    %c0_13 = arith.constant 0 : index
    %45 = vector.load %arg2[%c0_12, %c0_13] : memref<1x128xf32, #tpu.memory_space<vmem>>, vector<1x128xf32>
    %46 = vector.broadcast %45 : vector<1x128xf32> to vector<4x128xf32>
    %47 = arith.mulf %44, %46 : vector<4x128xf32>
    %c0_14 = arith.constant 0 : index
    %c0_15 = arith.constant 0 : index
    %48 = vector.load %arg3[%c0_14, %c0_15] : memref<1x128xf32, #tpu.memory_space<vmem>>, vector<1x128xf32>
    %49 = vector.broadcast %48 : vector<1x128xf32> to vector<4x128xf32>
    %50 = arith.addf %47, %49 : vector<4x128xf32>
    %c0_16 = arith.constant 0 : index
    %c0_17 = arith.constant 0 : index
    %51 = vector.load %arg4[%c0_16, %c0_17] : memref<4x128xf32, #tpu.memory_space<vmem>>, vector<4x128xf32>
    tpu.vector_store %arg4[%c0_16, %c0_17], %50 {strides = array<i32>} : memref<4x128xf32, #tpu.memory_space<vmem>>, vector<4x128xf32>,
    return
  }
  func.func @transform_0(%arg0: i32) -> (i32, i32) {
    %c0_i32 = arith.constant 0 : i32
    %c0_i32_0 = arith.constant 0 : i32
    return %arg0, %c0_i32 : i32, i32
  }
  func.func @transform_1(%arg0: i32) -> (i32, i32) {
    %c0_i32 = arith.constant 0 : i32
    %c0_i32_0 = arith.constant 0 : i32
    %c0_i32_1 = arith.constant 0 : i32
    return %c0_i32, %c0_i32_0 : i32, i32
  }
  func.func @transform_2(%arg0: i32) -> (i32, i32) {
    %c0_i32 = arith.constant 0 : i32
    %c0_i32_0 = arith.constant 0 : i32
    %c0_i32_1 = arith.constant 0 : i32
    return %c0_i32, %c0_i32_0 : i32, i32
  }
  func.func @transform_3(%arg0: i32) -> (i32, i32) {
    %c0_i32 = arith.constant 0 : i32
    %c0_i32_0 = arith.constant 0 : i32
    return %arg0, %c0_i32 : i32, i32
  }
}

</mosaic_0001>

<llo_original>
// kernel: tpu_custom_call.1
$region0: #{tpu_custom_call.1}
  #allocation0 [shape = 'u32[]', space=smem, size = 0x4, offset = 0x4, fixed_abs, tag = 'smem constant byte address 0x4 - core index']
  #allocation1 [shape = 'u32[144,128]{1,0:T(1,128)}', space=vmem, size = 0x12000, scoped, tag = 'internal scratch']
  %s0 = inlined_call_operand.hbm [shape: f32[4,128], index: 0, kind: input, shape index: {}]
  %s1 = inlined_call_operand.vmem [shape: f32[1,128], index: 1, kind: input, shape index: {}]
  %s2 = inlined_call_operand.vmem [shape: f32[1,128], index: 2, kind: input, shape index: {}]
  %s3 = inlined_call_operand.hbm [shape: f32[4,128], index: 3, kind: output, shape index: {}]
  %s4 = sld [smem:[#allocation0]]
  $region26: #{tpu_custom_call.1} parent=0
    _
  %s6 = ssub.s32 1, %s4
  %s7 = scalar_select 0, %s6, %s4
  $region1: #{tpu_custom_call.1} parent=0
    #allocation2 [shape = 'u8[2048]{0}', space=vmem, size = 0x800, scoped, tag = 'input window, operand 0, single buffered']
    #allocation3 [shape = 's32[1]{0}', space=sflag, size = 0x4, scoped, tag = 'scoped memory for tpu_custom_call.1']
    #allocation4 [shape = 's32[1]{0}', space=sflag, size = 0x4, scoped, tag = 'scoped memory for tpu_custom_call.1']
    #allocation5 [shape = 'u8[2048]{0}', space=vmem, size = 0x800, scoped, tag = 'output window, operand 0, single buffered']
    %8 = vsyncpa [#allocation3], 0
    %9 = vsyncpa [#allocation4], 0
    // Predicated region
    $region2: #{tpu_custom_call.1} parent=1 // pred_check
      _
    $region3: #{tpu_custom_call.1} parent=1 // pred_check_branch
      %11 = sbr.rel (0) target = $region5
    $region4: #{tpu_custom_call.1} parent=1 // pred_region
      %s13 = ssub.s32 64, 64
      %14 = vsyncadd [#allocation3], %s13
      %s16 = sshll.u32 [#allocation2], 4
      %s17 = int_to_ptr.vmem [resolvable:$true] %s16
      %19 = dma.hbm_to_vmem [thread:$0]  %s0, 64, %s17, [#allocation3]
    $region5: #{tpu_custom_call.1} parent=1 // pred_fallthru
      _
    // Predicated region
    $region6: #{tpu_custom_call.1} parent=1 // pred_check
      _
    $region7: #{tpu_custom_call.1} parent=1 // pred_check_branch
      %21 = sbr.rel (0) target = $region9
    $region8: #{tpu_custom_call.1} parent=1 // pred_region
      _
    $region9: #{tpu_custom_call.1} parent=1 // pred_fallthru
      _
    // Predicated region
    $region10: #{tpu_custom_call.1} parent=1 // pred_check
      _
    $region11: #{tpu_custom_call.1} parent=1 // pred_check_branch
      %23 = sbr.rel (0) target = $region13
    $region12: #{tpu_custom_call.1} parent=1 // pred_region
      _
    $region13: #{tpu_custom_call.1} parent=1 // pred_fallthru
      _
    // Predicated region
    $region14: #{tpu_custom_call.1} parent=1 // pred_check
      _
    $region15: #{tpu_custom_call.1} parent=1 // pred_check_branch
      %25 = sbr.rel (0) target = $region17
    $region16: #{tpu_custom_call.1} parent=1 // pred_region
      %26 = dma.done [#allocation3], 64
    $region17: #{tpu_custom_call.1} parent=1 // pred_fallthru
      _
    %v27 = vld [vmem:[#allocation2] sm:$0xf]
    %v28 = vlaneseq
    %v29 = vshrl.u32 %v28, 7
    %v30 = vadd.s32 %v29, 8
    %v31 = vadd.s32 %v29, 16
    %v32 = vadd.s32 %v29, 24
    %v33 = vadd.s32 %v29, 32
    %v34 = vadd.s32 %v29, 40
    %v35 = vadd.s32 %v29, 48
    %v36 = vadd.s32 %v29, 56
    %v37 = vadd.s32 %v29, 64
    %v38 = vadd.s32 %v29, 72
    %v39 = vadd.s32 %v29, 80
    %v40 = vadd.s32 %v29, 88
    %v41 = vadd.s32 %v29, 96
    %v42 = vadd.s32 %v29, 104
    %v43 = vadd.s32 %v29, 112
    %v44 = vadd.s32 %v29, 120
    %v45 = vlaneseq
    %v46 = vand.u32 %v45, 127
    %v47 = vmul.u32 %v46, 32
    %vm48 = vcmp.ge.s32.totalorder %v29, %v47
    %vm49 = vcmp.ge.s32.totalorder %v30, %v47
    %vm50 = vcmp.ge.s32.totalorder %v31, %v47
    %vm51 = vcmp.ge.s32.totalorder %v32, %v47
    %vm52 = vcmp.ge.s32.totalorder %v33, %v47
    %vm53 = vcmp.ge.s32.totalorder %v34, %v47
    %vm54 = vcmp.ge.s32.totalorder %v35, %v47
    %vm55 = vcmp.ge.s32.totalorder %v36, %v47
    %vm56 = vcmp.ge.s32.totalorder %v37, %v47
    %vm57 = vcmp.ge.s32.totalorder %v38, %v47
    %vm58 = vcmp.ge.s32.totalorder %v39, %v47
    %vm59 = vcmp.ge.s32.totalorder %v40, %v47
    %vm60 = vcmp.ge.s32.totalorder %v41, %v47
    %vm61 = vcmp.ge.s32.totalorder %v42, %v47
    %vm62 = vcmp.ge.s32.totalorder %v43, %v47
    %vm63 = vcmp.ge.s32.totalorder %v44, %v47
    %v64 = vadd.s32 %v46, 1
    %v65 = vmul.u32 %v64, 32
    %vm66 = vcmp.lt.s32.totalorder %v29, %v65
    %vm67 = vcmp.lt.s32.totalorder %v30, %v65
    %vm68 = vcmp.lt.s32.totalorder %v31, %v65
    %vm69 = vcmp.lt.s32.totalorder %v32, %v65
    %vm70 = vcmp.lt.s32.totalorder %v33, %v65
    %vm71 = vcmp.lt.s32.totalorder %v34, %v65
    %vm72 = vcmp.lt.s32.totalorder %v35, %v65
    %vm73 = vcmp.lt.s32.totalorder %v36, %v65
    %vm74 = vcmp.lt.s32.totalorder %v37, %v65
    %vm75 = vcmp.lt.s32.totalorder %v38, %v65
    %vm76 = vcmp.lt.s32.totalorder %v39, %v65
    %vm77 = vcmp.lt.s32.totalorder %v40, %v65
    %vm78 = vcmp.lt.s32.totalorder %v41, %v65
    %vm79 = vcmp.lt.s32.totalorder %v42, %v65
    %vm80 = vcmp.lt.s32.totalorder %v43, %v65
    %vm81 = vcmp.lt.s32.totalorder %v44, %v65
    %vm82 = vmand %vm48, %vm66
    %vm83 = vmand %vm49, %vm67
    %vm84 = vmand %vm50, %vm68
    %vm85 = vmand %vm51, %vm69
    %vm86 = vmand %vm52, %vm70
    %vm87 = vmand %vm53, %vm71
    %vm88 = vmand %vm54, %vm72
    %vm89 = vmand %vm55, %vm73
    %vm90 = vmand %vm56, %vm74
    %vm91 = vmand %vm57, %vm75
    %vm92 = vmand %vm58, %vm76
    %vm93 = vmand %vm59, %vm77
    %vm94 = vmand %vm60, %vm78
    %vm95 = vmand %vm61, %vm79
    %vm96 = vmand %vm62, %vm80
    %vm97 = vmand %vm63, %vm81
    %v98 = vsel %vm82, 1, 0
    %v99 = vsel %vm83, 1, 0
    %v100 = vsel %vm84, 1, 0
    %v101 = vsel %vm85, 1, 0
    %v102 = vsel %vm86, 1, 0
    %v103 = vsel %vm87, 1, 0
    %v104 = vsel %vm88, 1, 0
    %v105 = vsel %vm89, 1, 0
    %v106 = vsel %vm90, 1, 0
    %v107 = vsel %vm91, 1, 0
    %v108 = vsel %vm92, 1, 0
    %v109 = vsel %vm93, 1, 0
    %v110 = vsel %vm94, 1, 0
    %v111 = vsel %vm95, 1, 0
    %v112 = vsel %vm96, 1, 0
    %v113 = vsel %vm97, 1, 0
    %v114 = vcvt.s32.f32 %v98
    %v115 = vcvt.s32.f32 %v99
    %v116 = vcvt.s32.f32 %v100
    %v117 = vcvt.s32.f32 %v101
    %v118 = vcvt.s32.f32 %v102
    %v119 = vcvt.s32.f32 %v103
    %v120 = vcvt.s32.f32 %v104
    %v121 = vcvt.s32.f32 %v105
    %v122 = vcvt.s32.f32 %v106
    %v123 = vcvt.s32.f32 %v107
    %v124 = vcvt.s32.f32 %v108
    %v125 = vcvt.s32.f32 %v109
    %v126 = vcvt.s32.f32 %v110
    %v127 = vcvt.s32.f32 %v111
    %v128 = vcvt.s32.f32 %v112
    %v129 = vcvt.s32.f32 %v113
    %v130 = vmul.u32 %v29, 32
    %vm131 = vcmp.ge.s32.totalorder %v46, %v130
    %v132 = vadd.s32 %v29, 1
    %v133 = vmul.u32 %v132, 32
    %vm134 = vcmp.lt.s32.totalorder %v46, %v133
    %vm135 = vmand %vm131, %vm134
    %v136 = vsel %vm135, 1, 0
    %v137 = vcvt.s32.f32 %v136
    %138 = vmatprep.subr.mxu0 0.0
    %139 = vmatpush1.msra.mxu0 %v129
    %140 = vmatprep.subr.mxu0 0.0
    %141 = vmatpush1.msra.mxu0 %v128
    %142 = vmatprep.subr.mxu0 0.0
    %143 = vmatpush1.msra.mxu0 %v127
    %144 = vmatprep.subr.mxu0 0.0
    %145 = vmatpush1.msra.mxu0 %v126
    %146 = vmatprep.subr.mxu0 0.0
    %147 = vmatpush1.msra.mxu0 %v125
    %148 = vmatprep.subr.mxu0 0.0
    %149 = vmatpush1.msra.mxu0 %v124
    %150 = vmatprep.subr.mxu0 0.0
    %151 = vmatpush1.msra.mxu0 %v123
    %152 = vmatprep.subr.mxu0 0.0
    %153 = vmatpush1.msra.mxu0 %v122
    %154 = vmatprep.subr.mxu0 0.0
    %155 = vmatpush1.msra.mxu0 %v121
    %156 = vmatprep.subr.mxu0 0.0
    %157 = vmatpush1.msra.mxu0 %v120
    %158 = vmatprep.subr.mxu0 0.0
    %159 = vmatpush1.msra.mxu0 %v119
    %160 = vmatprep.subr.mxu0 0.0
    %161 = vmatpush1.msra.mxu0 %v118
    %162 = vmatprep.subr.mxu0 0.0
    %163 = vmatpush1.msra.mxu0 %v117
    %164 = vmatprep.subr.mxu0 0.0
    %165 = vmatpush1.msra.mxu0 %v116
    %166 = vmatprep.subr.mxu0 0.0
    %167 = vmatpush1.msra.mxu0 %v115
    %168 = vmatprep.subr.mxu0 0.0
    %169 = vmatpush1.msra.mxu0 %v114
    %170 = vmatprep.subr.mxu0 0.0
    %171 = vmatpush2.msra.mxu0 0.0
    %172 = vmatprep.subr.mxu0 0.0
    %173 = vmatpush2.msra.mxu0 0.0
    %174 = vmatprep.subr.mxu0 0.0
    %175 = vmatpush2.msra.mxu0 0.0
    %176 = vmatprep.subr.mxu0 0.0
    %177 = vmatpush2.msra.mxu0 0.0
    %178 = vmatprep.subr.mxu0 0.0
    %179 = vmatpush2.msra.mxu0 0.0
    %180 = vmatprep.subr.mxu0 0.0
    %181 = vmatpush2.msra.mxu0 0.0
    %182 = vmatprep.subr.mxu0 0.0
    %183 = vmatpush2.msra.mxu0 0.0
    %184 = vmatprep.subr.mxu0 0.0
    %185 = vmatpush2.msra.mxu0 0.0
    %186 = vmatprep.subr.mxu0 0.0
    %187 = vmatpush2.msra.mxu0 0.0
    %188 = vmatprep.subr.mxu0 0.0
    %189 = vmatpush2.msra.mxu0 0.0
    %190 = vmatprep.subr.mxu0 0.0
    %191 = vmatpush2.msra.mxu0 0.0
    %192 = vmatprep.subr.mxu0 0.0
    %193 = vmatpush2.msra.mxu0 0.0
    %194 = vmatprep.subr.mxu0 0.0
    %195 = vmatpush2.msra.mxu0 0.0
    %196 = vmatprep.subr.mxu0 0.0
    %197 = vmatpush2.msra.mxu0 0.0
    %198 = vmatprep.subr.mxu0 0.0
    %199 = vmatpush2.msra.mxu0 0.0
    %200 = vmatprep.subr.mxu0 0.0
    %201 = vmatpush2.msra.mxu0 0.0
    %202 = vmatprep.mubr.f32.mxu0 0.0
    %203 = vmatmul.mubr.f32.gmra.mxu0 %v27
    %v204 = vpop.f32.mrf.mxu0
    %v205 = vadd.f32 0.0, %v204
    %v206 = vpop.f32.mrf.mxu0
    %207 = vdwg.mxu0
    %v208 = vmul.f32 %v27, %v27
    %209 = vmatprep.subr.mxu0 0.0
    %210 = vmatpush1.msra.mxu0 %v129
    %211 = vmatprep.subr.mxu0 0.0
    %212 = vmatpush1.msra.mxu0 %v128
    %213 = vmatprep.subr.mxu0 0.0
    %214 = vmatpush1.msra.mxu0 %v127
    %215 = vmatprep.subr.mxu0 0.0
    %216 = vmatpush1.msra.mxu0 %v126
    %217 = vmatprep.subr.mxu0 0.0
    %218 = vmatpush1.msra.mxu0 %v125
    %219 = vmatprep.subr.mxu0 0.0
    %220 = vmatpush1.msra.mxu0 %v124
    %221 = vmatprep.subr.mxu0 0.0
    %222 = vmatpush1.msra.mxu0 %v123
    %223 = vmatprep.subr.mxu0 0.0
    %224 = vmatpush1.msra.mxu0 %v122
    %225 = vmatprep.subr.mxu0 0.0
    %226 = vmatpush1.msra.mxu0 %v121
    %227 = vmatprep.subr.mxu0 0.0
    %228 = vmatpush1.msra.mxu0 %v120
    %229 = vmatprep.subr.mxu0 0.0
    %230 = vmatpush1.msra.mxu0 %v119
    %231 = vmatprep.subr.mxu0 0.0
    %232 = vmatpush1.msra.mxu0 %v118
    %233 = vmatprep.subr.mxu0 0.0
    %234 = vmatpush1.msra.mxu0 %v117
    %235 = vmatprep.subr.mxu0 0.0
    %236 = vmatpush1.msra.mxu0 %v116
    %237 = vmatprep.subr.mxu0 0.0
    %238 = vmatpush1.msra.mxu0 %v115
    %239 = vmatprep.subr.mxu0 0.0
    %240 = vmatpush1.msra.mxu0 %v114
    %241 = vmatprep.subr.mxu0 0.0
    %242 = vmatpush2.msra.mxu0 0.0
    %243 = vmatprep.subr.mxu0 0.0
    %244 = vmatpush2.msra.mxu0 0.0
    %245 = vmatprep.subr.mxu0 0.0
    %246 = vmatpush2.msra.mxu0 0.0
    %247 = vmatprep.subr.mxu0 0.0
    %248 = vmatpush2.msra.mxu0 0.0
    %249 = vmatprep.subr.mxu0 0.0
    %250 = vmatpush2.msra.mxu0 0.0
    %251 = vmatprep.subr.mxu0 0.0
    %252 = vmatpush2.msra.mxu0 0.0
    %253 = vmatprep.subr.mxu0 0.0
    %254 = vmatpush2.msra.mxu0 0.0
    %255 = vmatprep.subr.mxu0 0.0
    %256 = vmatpush2.msra.mxu0 0.0
    %257 = vmatprep.subr.mxu0 0.0
    %258 = vmatpush2.msra.mxu0 0.0
    %259 = vmatprep.subr.mxu0 0.0
    %260 = vmatpush2.msra.mxu0 0.0
    %261 = vmatprep.subr.mxu0 0.0
    %262 = vmatpush2.msra.mxu0 0.0
    %263 = vmatprep.subr.mxu0 0.0
    %264 = vmatpush2.msra.mxu0 0.0
    %265 = vmatprep.subr.mxu0 0.0
    %266 = vmatpush2.msra.mxu0 0.0
    %267 = vmatprep.subr.mxu0 0.0
    %268 = vmatpush2.msra.mxu0 0.0
    %269 = vmatprep.subr.mxu0 0.0
    %270 = vmatpush2.msra.mxu0 0.0
    %271 = vmatprep.subr.mxu0 0.0
    %272 = vmatpush2.msra.mxu0 0.0
    %273 = vmatprep.mubr.f32.mxu0 0.0
    %274 = vmatmul.mubr.f32.gmra.mxu0 %v208
    %v275 = vpop.f32.mrf.mxu0
    %v276 = vadd.f32 0.0, %v275
    %v277 = vpop.f32.mrf.mxu0
    %278 = vdwg.mxu0
    %v279 = vmul.f32 %v205, 0.03125
    %v280 = vmul.f32 %v276, 0.03125
    %v281 = vmul.f32 %v279, %v279
    %v282 = vsub.f32 %v280, %v281
    %v283 = vmax.f32 %v282, 0.0
    %v284 = vadd.f32 %v283, 1e-05
    %v285 = vrsqrt.pop %v284
    %vm286 = vcmask 31744
    %v288 = vsel %vm286, %v279, 0
    %vm290 = vcmask 1043456
    %v292 = vsel %vm290, %v137, 0
    %294 = vmatprep.subr.mxu0 0.0
    %295 = vmatpush1.msra.mxu0 0.0
    %296 = vmatprep.subr.mxu0 0.0
    %297 = vmatpush1.msra.mxu0 0.0
    %298 = vmatprep.subr.mxu0 0.0
    %299 = vmatpush1.msra.mxu0 0.0
    %300 = vmatprep.subr.mxu0 0.0
    %301 = vmatpush1.msra.mxu0 0.0
    %302 = vmatprep.subr.mxu0 0.0
    %303 = vmatpush1.msra.mxu0 0.0
    %304 = vmatprep.subr.mxu0 0.0
    %305 = vmatpush1.msra.mxu0 0.0
    %306 = vmatprep.subr.mxu0 0.0
    %307 = vmatpush1.msra.mxu0 0.0
    %308 = vmatprep.subr.mxu0 0.0
    %309 = vmatpush1.msra.mxu0 0.0
    %310 = vmatprep.subr.mxu0 0.0
    %311 = vmatpush1.msra.mxu0 0.0
    %312 = vmatprep.subr.mxu0 0.0
    %313 = vmatpush1.msra.mxu0 0.0
    %314 = vmatprep.subr.mxu0 0.0
    %315 = vmatpush1.msra.mxu0 0.0
    %316 = vmatprep.subr.mxu0 0.0
    %317 = vmatpush1.msra.mxu0 0.0
    %318 = vmatprep.subr.mxu0 0.0
    %319 = vmatpush1.msra.mxu0 0.0
    %320 = vmatprep.subr.mxu0 0.0
    %321 = vmatpush1.msra.mxu0 0.0
    %322 = vmatprep.subr.mxu0 0.0
    %323 = vmatpush1.msra.mxu0 0.0
    %324 = vmatprep.subr.mxu0 0.0
    %325 = vmatpush1.msra.mxu0 %v292
    %326 = vmatprep.subr.mxu0 0.0
    %327 = vmatpush2.msra.mxu0 0.0
    %328 = vmatprep.subr.mxu0 0.0
    %329 = vmatpush2.msra.mxu0 0.0
    %330 = vmatprep.subr.mxu0 0.0
    %331 = vmatpush2.msra.mxu0 0.0
    %332 = vmatprep.subr.mxu0 0.0
    %333 = vmatpush2.msra.mxu0 0.0
    %334 = vmatprep.subr.mxu0 0.0
    %335 = vmatpush2.msra.mxu0 0.0
    %336 = vmatprep.subr.mxu0 0.0
    %337 = vmatpush2.msra.mxu0 0.0
    %338 = vmatprep.subr.mxu0 0.0
    %339 = vmatpush2.msra.mxu0 0.0
    %340 = vmatprep.subr.mxu0 0.0
    %341 = vmatpush2.msra.mxu0 0.0
    %342 = vmatprep.subr.mxu0 0.0
    %343 = vmatpush2.msra.mxu0 0.0
    %344 = vmatprep.subr.mxu0 0.0
    %345 = vmatpush2.msra.mxu0 0.0
    %346 = vmatprep.subr.mxu0 0.0
    %347 = vmatpush2.msra.mxu0 0.0
    %348 = vmatprep.subr.mxu0 0.0
    %349 = vmatpush2.msra.mxu0 0.0
    %350 = vmatprep.subr.mxu0 0.0
    %351 = vmatpush2.msra.mxu0 0.0
    %352 = vmatprep.subr.mxu0 0.0
    %353 = vmatpush2.msra.mxu0 0.0
    %354 = vmatprep.subr.mxu0 0.0
    %355 = vmatpush2.msra.mxu0 0.0
    %356 = vmatprep.subr.mxu0 0.0
    %357 = vmatpush2.msra.mxu0 0.0
    %358 = vmatprep.mubr.f32.mxu0 0.0
    %359 = vmatmul.mubr.f32.gmra.mxu0 %v288
    %v360 = vpop.f32.mrf.mxu0
    %v361 = vadd.f32 0.0, %v360
    %v362 = vpop.f32.mrf.mxu0
    %363 = vdwg.mxu0
    %v365 = vsel %vm286, %v285, 0
    %367 = vmatprep.subr.mxu0 0.0
    %368 = vmatpush1.msra.mxu0 0.0
    %369 = vmatprep.subr.mxu0 0.0
    %370 = vmatpush1.msra.mxu0 0.0
    %371 = vmatprep.subr.mxu0 0.0
    %372 = vmatpush1.msra.mxu0 0.0
    %373 = vmatprep.subr.mxu0 0.0
    %374 = vmatpush1.msra.mxu0 0.0
    %375 = vmatprep.subr.mxu0 0.0
    %376 = vmatpush1.msra.mxu0 0.0
    %377 = vmatprep.subr.mxu0 0.0
    %378 = vmatpush1.msra.mxu0 0.0
    %379 = vmatprep.subr.mxu0 0.0
    %380 = vmatpush1.msra.mxu0 0.0
    %381 = vmatprep.subr.mxu0 0.0
    %382 = vmatpush1.msra.mxu0 0.0
    %383 = vmatprep.subr.mxu0 0.0
    %384 = vmatpush1.msra.mxu0 0.0
    %385 = vmatprep.subr.mxu0 0.0
    %386 = vmatpush1.msra.mxu0 0.0
    %387 = vmatprep.subr.mxu0 0.0
    %388 = vmatpush1.msra.mxu0 0.0
    %389 = vmatprep.subr.mxu0 0.0
    %390 = vmatpush1.msra.mxu0 0.0
    %391 = vmatprep.subr.mxu0 0.0
    %392 = vmatpush1.msra.mxu0 0.0
    %393 = vmatprep.subr.mxu0 0.0
    %394 = vmatpush1.msra.mxu0 0.0
    %395 = vmatprep.subr.mxu0 0.0
    %396 = vmatpush1.msra.mxu0 0.0
    %397 = vmatprep.subr.mxu0 0.0
    %398 = vmatpush1.msra.mxu0 %v292
    %399 = vmatprep.subr.mxu0 0.0
    %400 = vmatpush2.msra.mxu0 0.0
    %401 = vmatprep.subr.mxu0 0.0
    %402 = vmatpush2.msra.mxu0 0.0
    %403 = vmatprep.subr.mxu0 0.0
    %404 = vmatpush2.msra.mxu0 0.0
    %405 = vmatprep.subr.mxu0 0.0
    %406 = vmatpush2.msra.mxu0 0.0
    %407 = vmatprep.subr.mxu0 0.0
    %408 = vmatpush2.msra.mxu0 0.0
    %409 = vmatprep.subr.mxu0 0.0
    %410 = vmatpush2.msra.mxu0 0.0
    %411 = vmatprep.subr.mxu0 0.0
    %412 = vmatpush2.msra.mxu0 0.0
    %413 = vmatprep.subr.mxu0 0.0
    %414 = vmatpush2.msra.mxu0 0.0
    %415 = vmatprep.subr.mxu0 0.0
    %416 = vmatpush2.msra.mxu0 0.0
    %417 = vmatprep.subr.mxu0 0.0
    %418 = vmatpush2.msra.mxu0 0.0
    %419 = vmatprep.subr.mxu0 0.0
    %420 = vmatpush2.msra.mxu0 0.0
    %421 = vmatprep.subr.mxu0 0.0
    %422 = vmatpush2.msra.mxu0 0.0
    %423 = vmatprep.subr.mxu0 0.0
    %424 = vmatpush2.msra.mxu0 0.0
    %425 = vmatprep.subr.mxu0 0.0
    %426 = vmatpush2.msra.mxu0 0.0
    %427 = vmatprep.subr.mxu0 0.0
    %428 = vmatpush2.msra.mxu0 0.0
    %429 = vmatprep.subr.mxu0 0.0
    %430 = vmatpush2.msra.mxu0 0.0
    %431 = vmatprep.mubr.f32.mxu0 0.0
    %432 = vmatmul.mubr.f32.gmra.mxu0 %v365
    %v433 = vpop.f32.mrf.mxu0
    %v434 = vadd.f32 0.0, %v433
    %v435 = vpop.f32.mrf.mxu0
    %436 = vdwg.mxu0
    %v437 = vsub.f32 %v27, %v361
    %v438 = vmul.f32 %v437, %v434
    %v439 = vld [vmem:[%s1] sm:$0x1]
    %v441 = vlaneseq
    %v442 = vshrl.u32 %v441, 7
    %v443 = vsub.s32 0, %v442
    %v444 = vrot.slane %v439, %v443
    %v446 = vmul.f32 %v438, %v444
    %v447 = vld [vmem:[%s2] sm:$0x1]
    %v449 = vlaneseq
    %v450 = vshrl.u32 %v449, 7
    %v451 = vsub.s32 0, %v450
    %v452 = vrot.slane %v447, %v451
    %v454 = vadd.f32 %v446, %v452
    %455 = vst [vmem:[#allocation5] sm:$0xf] %v454
    // Predicated region
    $region18: #{tpu_custom_call.1} parent=1 // pred_check
      _
    $region19: #{tpu_custom_call.1} parent=1 // pred_check_branch
      %457 = sbr.rel (0) target = $region21
    $region20: #{tpu_custom_call.1} parent=1 // pred_region
      %s459 = ssub.s32 64, 64
      %460 = vsyncadd [#allocation4], %s459
      %s462 = sshll.u32 [#allocation5], 4
      %s463 = int_to_ptr.vmem [resolvable:$true] %s462
      %465 = dma.vmem_to_hbm [thread:$0]  %s463, 64, %s3, [#allocation4]
    $region21: #{tpu_custom_call.1} parent=1 // pred_fallthru
      _
    // Predicated region
    $region22: #{tpu_custom_call.1} parent=1 // pred_check
      _
    $region23: #{tpu_custom_call.1} parent=1 // pred_check_branch
      %467 = sbr.rel (0) target = $region25
    $region24: #{tpu_custom_call.1} parent=1 // pred_region
      %468 = dma.done [#allocation4], 64
    $region25: #{tpu_custom_call.1} parent=1 // pred_fallthru
      _
    %469 = vsyncpa [#allocation3], 1
    %470 = vsyncpa [#allocation4], 1

</llo_original>
